<compile_context>
chip_gen: v7x
topology: tpu7x:2x2x1
jax: 0.10.0
libtpu: 0.0.40
codegen_flags: <defaults>
</compile_context>

<pallas_src>
import jax
import jax.numpy as jnp
from jax.experimental import pallas as pl
from jax.experimental.pallas import tpu as pltpu


def attn_pool_kernel(x_ref, w_ref, b_ref, o_ref):
    # x_ref: (BN, T, H) VMEM, w_ref: (1, H) VMEM, b_ref: (1,) SMEM,
    # o_ref: (BN, H) VMEM.
    xf = x_ref[...].astype(jnp.float32)                 # (BN, T, H)
    w = w_ref[...].astype(jnp.float32)                  # (1, H)
    b = b_ref[0]                                        # scalar (SMEM)

    # att_logits = x @ W^T + b, kept lane-dense as (BN, T).
    logits = jnp.sum(xf * w, axis=-1) + b               # (BN, T)

    # Numerically stable softmax over the sequence axis T (lane axis here).
    m = jnp.max(logits, axis=-1, keepdims=True)         # (BN, 1)
    p = jnp.exp(logits - m)                             # (BN, T)
    denom = jnp.sum(p, axis=-1, keepdims=True)          # (BN, 1)
    att_w = p * pl.reciprocal(denom, approx=False)      # (BN, T)

    # utter_rep = sum_T (x * att_w)  -> (BN, H)
    out = jnp.sum(xf * att_w[:, :, None], axis=1)       # (BN, H) in f32
    o_ref[...] = out.astype(o_ref.dtype)


def _choose_block_n(N, T, H, itemsize, target_bytes=4 << 20):
    """Pick a batch block size BN (multiple of 8) sized against VMEM budget."""
    per_sample = max(1, T * H * itemsize)
    bn = max(1, target_bytes // per_sample)
    bn = max(8, (bn // 8) * 8)                # multiple of 8 → dense sublane writes
    n_pad8 = -(-N // 8) * 8
    bn = min(bn, n_pad8)
    # Keep >= 2 grid steps when there is enough work (v7x megacore sharding).
    if n_pad8 // bn < 2 and n_pad8 >= 16:
        bn = max(8, ((n_pad8 // 2) // 8) * 8)
    return bn


def attention_pooling(batch_rep, w, b):
    """batch_rep: (N, T, H), w: (1, H), b: (1,) -> (N, H)"""
    N, T, H = batch_rep.shape
    bn = _choose_block_n(N, T, H, batch_rep.dtype.itemsize)
    n_pad = pl.cdiv(N, bn) * bn

    x = batch_rep
    if n_pad != N:
        # Zero-pad the batch axis; padded rows are discarded after the call.
        x = jnp.pad(x, ((0, n_pad - N), (0, 0), (0, 0)))

    out = pl.pallas_call(
        attn_pool_kernel,
        out_shape=jax.ShapeDtypeStruct((n_pad, H), batch_rep.dtype),
        grid=(n_pad // bn,),
        in_specs=[
            pl.BlockSpec((bn, T, H), lambda n: (n, 0, 0)),            # x tile
            pl.BlockSpec((1, H), lambda n: (0, 0)),                   # W (resident)
            pl.BlockSpec(memory_space=pltpu.MemorySpace.SMEM),        # bias scalar
        ],
        out_specs=pl.BlockSpec((bn, H), lambda n: (n, 0)),
        compiler_params=pltpu.CompilerParams(
            dimension_semantics=("parallel",)),
    )(x, w, b)
    return out[:N]


def attention_pooling_ref(batch_rep, w, b):
    # Pure-JAX reference mirroring the PyTorch forward (att_mask=None path).
    att_logits = jnp.einsum("nth,oh->nto", batch_rep, w)[..., 0] + b[0]  # (N, T)
    att_w = jax.nn.softmax(att_logits, axis=-1)[..., None]               # (N, T, 1)
    return jnp.sum(batch_rep * att_w, axis=1)                            # (N, H)


if __name__ == "__main__":
    key = jax.random.PRNGKey(0)
    kx, kw, kb, kx2 = jax.random.split(key, 4)

    # Small test (N=2, T=8, H=32): exercises batch padding (2 -> 8), grid=1.
    N, T, H = 2, 8, 32
    batch_rep = jax.random.normal(kx, (N, T, H), dtype=jnp.float32)
    # nn.Linear(H, 1): weight (1, H), bias (1,) — deterministic synthetic init.
    w = jax.random.normal(kw, (1, H), dtype=jnp.float32) * (1.0 / jnp.sqrt(H))
    b = jax.random.normal(kb, (1,), dtype=jnp.float32) * 0.01

    out = attention_pooling(batch_rep, w, b)
    jax.block_until_ready(out)
    ref = attention_pooling_ref(batch_rep, w, b)
    assert out.shape == (N, H)
    assert jnp.allclose(out, ref, atol=1e-5, rtol=1e-5), (out, ref)

    # Second test (N=20): exercises multiple grid steps + batch padding.
    N2 = 20
    batch_rep2 = jax.random.normal(kx2, (N2, T, H), dtype=jnp.float32)
    out2 = attention_pooling(batch_rep2, w, b)
    jax.block_until_ready(out2)
    ref2 = attention_pooling_ref(batch_rep2, w, b)
    assert out2.shape == (N2, H)
    assert jnp.allclose(out2, ref2, atol=1e-5, rtol=1e-5), (out2, ref2)

    print("KERNEL_OK")
</pallas_src>

<mosaic_0001>
module attributes {stable_mosaic.version = 11 : i64} {
  func.func @attn_pool_kernel(%arg0: i32, %arg1: memref<8x8x32xf32, #tpu.memory_space<vmem>>, %arg2: memref<1x32xf32, #tpu.memory_space<vmem>>, %arg3: memref<1xf32, #tpu.memory_space<smem>>, %arg4: memref<8x32xf32, #tpu.memory_space<vmem>>) attributes {dimension_semantics = [#tpu.dimension_semantics<parallel>], iteration_bounds = array<i64: 1>, scalar_prefetch = 0 : i64, scratch_operands = 0 : i64, tpu.core_type = #tpu.core_type<tc>, window_params = [{transform_indices = @transform_0, window_bounds = array<i64: 8, 8, 32>}, {pipeline_mode = #tpu.pipeline_mode<synchronous>, transform_indices = @transform_1, window_bounds = array<i64: 1, 32>}, {transform_indices = @transform_2, window_bounds = array<i64: 1>}, {transform_indices = @transform_3, window_bounds = array<i64: 8, 32>}]} {
    %c0 = arith.constant 0 : index
    %c0_0 = arith.constant 0 : index
    %c0_1 = arith.constant 0 : index
    %0 = vector.load %arg1[%c0, %c0_0, %c0_1] : memref<8x8x32xf32, #tpu.memory_space<vmem>>, vector<8x8x32xf32>
    %c0_2 = arith.constant 0 : index
    %c0_3 = arith.constant 0 : index
    %1 = vector.load %arg2[%c0_2, %c0_3] : memref<1x32xf32, #tpu.memory_space<vmem>>, vector<1x32xf32>
    %c0_4 = arith.constant 0 : index
    %2 = memref.load %arg3[%c0_4] : memref<1xf32, #tpu.memory_space<smem>>
    %3 = vector.shape_cast %1 : vector<1x32xf32> to vector<1x1x32xf32>
    %4 = vector.broadcast %3 : vector<1x1x32xf32> to vector<8x8x32xf32>
    %5 = arith.mulf %0, %4 : vector<8x8x32xf32>
    %cst = arith.constant dense<0.000000e+00> : vector<8x8xf32>
    %6 = vector.multi_reduction <add>, %5, %cst [2] : vector<8x8x32xf32> to vector<8x8xf32>
    %7 = vector.broadcast %2 : f32 to vector<8x8xf32>
    %8 = arith.addf %6, %7 : vector<8x8xf32>
    %cst_5 = arith.constant dense<0xFF800000> : vector<8xf32>
    %9 = vector.multi_reduction <maximumf>, %8, %cst_5 [1] : vector<8x8xf32> to vector<8xf32>
    %10 = vector.shape_cast %9 : vector<8xf32> to vector<8x1xf32>
    %11 = vector.broadcast %10 : vector<8x1xf32> to vector<8x8xf32>
    %12 = arith.subf %8, %11 : vector<8x8xf32>
    %13 = math.exp %12 : vector<8x8xf32>
    %cst_6 = arith.constant dense<0.000000e+00> : vector<8xf32>
    %14 = vector.multi_reduction <add>, %13, %cst_6 [1] : vector<8x8xf32> to vector<8xf32>
    %15 = vector.shape_cast %14 : vector<8xf32> to vector<8x1xf32>
    %16 = tpu.reciprocal %15 : vector<8x1xf32> -> vector<8x1xf32>
    %17 = vector.broadcast %16 : vector<8x1xf32> to vector<8x8xf32>
    %18 = arith.mulf %13, %17 : vector<8x8xf32>
    %19 = vector.shape_cast %18 : vector<8x8xf32> to vector<8x8x1xf32>
    %20 = vector.broadcast %19 : vector<8x8x1xf32> to vector<8x8x32xf32>
    %21 = arith.mulf %0, %20 : vector<8x8x32xf32>
    %cst_7 = arith.constant dense<0.000000e+00> : vector<8x32xf32>
    %22 = vector.multi_reduction <add>, %21, %cst_7 [1] : vector<8x8x32xf32> to vector<8x32xf32>
    %c0_8 = arith.constant 0 : index
    %c0_9 = arith.constant 0 : index
    %23 = vector.load %arg4[%c0_8, %c0_9] : memref<8x32xf32, #tpu.memory_space<vmem>>, vector<8x32xf32>
    tpu.vector_store %arg4[%c0_8, %c0_9], %22 {strides = array<i32>} : memref<8x32xf32, #tpu.memory_space<vmem>>, vector<8x32xf32>,
    return
  }
  func.func @transform_0(%arg0: i32) -> (i32, i32, i32) {
    %c0_i32 = arith.constant 0 : i32
    %c0_i32_0 = arith.constant 0 : i32
    %c0_i32_1 = arith.constant 0 : i32
    return %arg0, %c0_i32, %c0_i32_0 : i32, i32, i32
  }
  func.func @transform_1(%arg0: i32) -> (i32, i32) {
    %c0_i32 = arith.constant 0 : i32
    %c0_i32_0 = arith.constant 0 : i32
    %c0_i32_1 = arith.constant 0 : i32
    return %c0_i32, %c0_i32_0 : i32, i32
  }
  func.func @transform_2(%arg0: i32) -> i32 {
    %c0_i32 = arith.constant 0 : i32
    %c0_i32_0 = arith.constant 0 : i32
    return %c0_i32 : i32
  }
  func.func @transform_3(%arg0: i32) -> (i32, i32) {
    %c0_i32 = arith.constant 0 : i32
    %c0_i32_0 = arith.constant 0 : i32
    return %arg0, %c0_i32 : i32, i32
  }
}

</mosaic_0001>

<llo_original>
// kernel: tpu_custom_call.1
$region0: #{tpu_custom_call.1}
  #allocation0 [shape = 'u32[]', space=smem, size = 0x4, offset = 0x4, fixed_abs, tag = 'smem constant byte address 0x4 - core index']
  #allocation1 [shape = 'u32[144,128]{1,0:T(1,128)}', space=vmem, size = 0x12000, scoped, tag = 'internal scratch']
  #allocation2 [shape = 'f32[1]{0:T(128)S(6)}', space=smem, size = 0x200, scoped, tag = 'scoped memory for tpu_custom_call.1']
  %s0 = inlined_call_operand.hbm [shape: f32[8,8,32], index: 0, kind: input, shape index: {}]
  %s1 = inlined_call_operand.vmem [shape: f32[1,32], index: 1, kind: input, shape index: {}]
  %s2 = inlined_call_operand.<no memory space> [shape: f32[1], index: 2, kind: input, shape index: {}]
  %s3 = inlined_call_operand.hbm [shape: f32[8,32], index: 3, kind: output, shape index: {}]
  %s4 = sld [smem:[#allocation0]]
  $region26: #{tpu_custom_call.1} parent=0
    _
  %s6 = ssub.s32 1, %s4
  %s7 = scalar_select 0, %s6, %s4
  %8 = sst [smem:[#allocation2]] %s2
  $region1: #{tpu_custom_call.1} parent=0
    #allocation3 [shape = 'u8[32768]{0}', space=vmem, size = 0x8000, scoped, tag = 'input window, operand 0, single buffered']
    #allocation4 [shape = 's32[1]{0}', space=sflag, size = 0x4, scoped, tag = 'scoped memory for tpu_custom_call.1']
    #allocation5 [shape = 's32[1]{0}', space=sflag, size = 0x4, scoped, tag = 'scoped memory for tpu_custom_call.1']
    #allocation6 [shape = 'u8[4096]{0}', space=vmem, size = 0x1000, scoped, tag = 'output window, operand 0, single buffered']
    %9 = vsyncpa [#allocation4], 0
    %10 = vsyncpa [#allocation5], 0
    // Predicated region
    $region2: #{tpu_custom_call.1} parent=1 // pred_check
      _
    $region3: #{tpu_custom_call.1} parent=1 // pred_check_branch
      %12 = sbr.rel (0) target = $region5
    $region4: #{tpu_custom_call.1} parent=1 // pred_region
      %s14 = ssub.s32 1024, 1024
      %15 = vsyncadd [#allocation4], %s14
      %s16 = sshll.u32 [#allocation3], 4
      %s17 = int_to_ptr.vmem [resolvable:$true] %s16
      %22 = dma.hbm_to_vmem [thread:$0]  %s0, 1024, %s17, [#allocation4], 128, 128, 8
    $region5: #{tpu_custom_call.1} parent=1 // pred_fallthru
      _
    // Predicated region
    $region6: #{tpu_custom_call.1} parent=1 // pred_check
      _
    $region7: #{tpu_custom_call.1} parent=1 // pred_check_branch
      %24 = sbr.rel (0) target = $region9
    $region8: #{tpu_custom_call.1} parent=1 // pred_region
      _
    $region9: #{tpu_custom_call.1} parent=1 // pred_fallthru
      _
    // Predicated region
    $region10: #{tpu_custom_call.1} parent=1 // pred_check
      _
    $region11: #{tpu_custom_call.1} parent=1 // pred_check_branch
      %26 = sbr.rel (0) target = $region13
    $region12: #{tpu_custom_call.1} parent=1 // pred_region
      _
    $region13: #{tpu_custom_call.1} parent=1 // pred_fallthru
      _
    // Predicated region
    $region14: #{tpu_custom_call.1} parent=1 // pred_check
      _
    $region15: #{tpu_custom_call.1} parent=1 // pred_check_branch
      %28 = sbr.rel (0) target = $region17
    $region16: #{tpu_custom_call.1} parent=1 // pred_region
      %29 = dma.done [#allocation4], 1024
    $region17: #{tpu_custom_call.1} parent=1 // pred_fallthru
      _
    %v30 = vld [vmem:[#allocation3] sm:$0xff]
    %v31 = vld [vmem:[#allocation3 + $0x8] sm:$0xff]
    %v32 = vld [vmem:[#allocation3 + $0x10] sm:$0xff]
    %v33 = vld [vmem:[#allocation3 + $0x18] sm:$0xff]
    %v34 = vld [vmem:[#allocation3 + $0x20] sm:$0xff]
    %v35 = vld [vmem:[#allocation3 + $0x28] sm:$0xff]
    %v36 = vld [vmem:[#allocation3 + $0x30] sm:$0xff]
    %v37 = vld [vmem:[#allocation3 + $0x38] sm:$0xff]
    %v38 = vld [vmem:[%s1] sm:$0x1]
    %s39 = sld [smem:[#allocation2]]
    %v41 = vlaneseq
    %v42 = vshrl.u32 %v41, 7
    %v43 = vsub.s32 0, %v42
    %v44 = vrot.slane %v38, %v43
    %v46 = vmul.f32 %v30, %v44
    %v47 = vmul.f32 %v31, %v44
    %v48 = vmul.f32 %v32, %v44
    %v49 = vmul.f32 %v33, %v44
    %v50 = vmul.f32 %v34, %v44
    %v51 = vmul.f32 %v35, %v44
    %v52 = vmul.f32 %v36, %v44
    %v53 = vmul.f32 %v37, %v44
    %vm54 = vcmask 261120
    %v55 = vsel %vm54, %v46, 0.0
    %56 = vadd.xlane.f32.xlu0 %v55
    %v57 = vpop.xlane.xlu0 %56
    %v58 = vsel %vm54, %v47, 0.0
    %59 = vadd.xlane.f32.xlu0 %v58
    %v60 = vpop.xlane.xlu0 %59
    %v61 = vsel %vm54, %v48, 0.0
    %62 = vadd.xlane.f32.xlu0 %v61
    %v63 = vpop.xlane.xlu0 %62
    %v64 = vsel %vm54, %v49, 0.0
    %65 = vadd.xlane.f32.xlu0 %v64
    %v66 = vpop.xlane.xlu0 %65
    %v67 = vsel %vm54, %v50, 0.0
    %68 = vadd.xlane.f32.xlu0 %v67
    %v69 = vpop.xlane.xlu0 %68
    %v70 = vsel %vm54, %v51, 0.0
    %71 = vadd.xlane.f32.xlu0 %v70
    %v72 = vpop.xlane.xlu0 %71
    %v73 = vsel %vm54, %v52, 0.0
    %74 = vadd.xlane.f32.xlu0 %v73
    %v75 = vpop.xlane.xlu0 %74
    %v76 = vsel %vm54, %v53, 0.0
    %77 = vadd.xlane.f32.xlu0 %v76
    %v78 = vpop.xlane.xlu0 %77
    %v79 = vstv %s39
    %v80 = vadd.f32 %v57, %v79
    %v81 = vadd.f32 %v60, %v79
    %v82 = vadd.f32 %v63, %v79
    %v83 = vadd.f32 %v66, %v79
    %v84 = vadd.f32 %v69, %v79
    %v85 = vadd.f32 %v72, %v79
    %v86 = vadd.f32 %v75, %v79
    %v87 = vadd.f32 %v78, %v79
    %v96 = vlaneseq
    %v97 = vand.u32 %v96, 127
    %v98 = vlaneseq
    %v99 = vshrl.u32 %v98, 7
    %v100 = vsub.s32 %v97, %v99
    %v101 = vrot.slane %v80, %v100
    %v102 = vlaneseq
    %v103 = vshrl.u32 %v102, 7
    %v104 = vsub.s32 %v97, %v103
    %v105 = vrot.slane %v81, %v104
    %v106 = vlaneseq
    %v107 = vshrl.u32 %v106, 7
    %v108 = vsub.s32 %v97, %v107
    %v109 = vrot.slane %v82, %v108
    %v110 = vlaneseq
    %v111 = vshrl.u32 %v110, 7
    %v112 = vsub.s32 %v97, %v111
    %v113 = vrot.slane %v83, %v112
    %v114 = vlaneseq
    %v115 = vshrl.u32 %v114, 7
    %v116 = vsub.s32 %v97, %v115
    %v117 = vrot.slane %v84, %v116
    %v118 = vlaneseq
    %v119 = vshrl.u32 %v118, 7
    %v120 = vsub.s32 %v97, %v119
    %v121 = vrot.slane %v85, %v120
    %v122 = vlaneseq
    %v123 = vshrl.u32 %v122, 7
    %v124 = vsub.s32 %v97, %v123
    %v125 = vrot.slane %v86, %v124
    %v126 = vlaneseq
    %v127 = vshrl.u32 %v126, 7
    %v128 = vsub.s32 %v97, %v127
    %v129 = vrot.slane %v87, %v128
    %vm130 = vcmask 1041409
    %v131 = vsel %vm130, %v105, %v101
    %vm132 = vcmask 1042434
    %v133 = vsel %vm132, %v109, %v131
    %vm134 = vcmask 1043459
    %v135 = vsel %vm134, %v113, %v133
    %vm136 = vcmask 1044484
    %v137 = vsel %vm136, %v117, %v135
    %vm138 = vcmask 1045509
    %v139 = vsel %vm138, %v121, %v137
    %vm140 = vcmask 1046534
    %v141 = vsel %vm140, %v125, %v139
    %vm142 = vcmask 1047559
    %v143 = vsel %vm142, %v129, %v141
    %vm145 = vcmask 64512
    %v146 = vsel %vm145, %v143, -inf
    %147 = vmax.xlane.f32.xlu0 %v146
    %v148 = vpop.xlane.xlu0 %147
    %v150 = vlaneseq
    %v151 = vshrl.u32 %v150, 7
    %v152 = vsub.s32 0, %v151
    %v153 = vrot.slane %v148, %v152
    %v154 = vlaneseq
    %v155 = vshrl.u32 %v154, 7
    %v156 = vsub.s32 1, %v155
    %v157 = vrot.slane %v148, %v156
    %v158 = vlaneseq
    %v159 = vshrl.u32 %v158, 7
    %v160 = vsub.s32 2, %v159
    %v161 = vrot.slane %v148, %v160
    %v162 = vlaneseq
    %v163 = vshrl.u32 %v162, 7
    %v164 = vsub.s32 3, %v163
    %v165 = vrot.slane %v148, %v164
    %v166 = vlaneseq
    %v167 = vshrl.u32 %v166, 7
    %v168 = vsub.s32 4, %v167
    %v169 = vrot.slane %v148, %v168
    %v170 = vlaneseq
    %v171 = vshrl.u32 %v170, 7
    %v172 = vsub.s32 5, %v171
    %v173 = vrot.slane %v148, %v172
    %v174 = vlaneseq
    %v175 = vshrl.u32 %v174, 7
    %v176 = vsub.s32 6, %v175
    %v177 = vrot.slane %v148, %v176
    %v178 = vlaneseq
    %v179 = vshrl.u32 %v178, 7
    %v180 = vsub.s32 7, %v179
    %v181 = vrot.slane %v148, %v180
    %v190 = vsub.f32 %v80, %v153
    %v191 = vsub.f32 %v81, %v157
    %v192 = vsub.f32 %v82, %v161
    %v193 = vsub.f32 %v83, %v165
    %v194 = vsub.f32 %v84, %v169
    %v195 = vsub.f32 %v85, %v173
    %v196 = vsub.f32 %v86, %v177
    %v197 = vsub.f32 %v87, %v181
    %v198 = vmul.f32 %v190, 1.442695
    %v199 = vpow.pop %v198
    %v200 = vmul.f32 %v191, 1.442695
    %v201 = vpow.pop %v200
    %v202 = vmul.f32 %v192, 1.442695
    %v203 = vpow.pop %v202
    %v204 = vmul.f32 %v193, 1.442695
    %v205 = vpow.pop %v204
    %v206 = vmul.f32 %v194, 1.442695
    %v207 = vpow.pop %v206
    %v208 = vmul.f32 %v195, 1.442695
    %v209 = vpow.pop %v208
    %v210 = vmul.f32 %v196, 1.442695
    %v211 = vpow.pop %v210
    %v212 = vmul.f32 %v197, 1.442695
    %v213 = vpow.pop %v212
    %222 = vset.pattern.permute.xlu0 0
    %223 = vperm.xlu0 %222, %v199
    %v224 = vpop.permute.xlu0 %223
    %225 = vset.pattern.permute.xlu0 0
    %226 = vperm.xlu0 %225, %v201
    %v227 = vpop.permute.xlu0 %226
    %228 = vset.pattern.permute.xlu0 0
    %229 = vperm.xlu0 %228, %v203
    %v230 = vpop.permute.xlu0 %229
    %231 = vset.pattern.permute.xlu0 0
    %232 = vperm.xlu0 %231, %v205
    %v233 = vpop.permute.xlu0 %232
    %234 = vset.pattern.permute.xlu0 0
    %235 = vperm.xlu0 %234, %v207
    %v236 = vpop.permute.xlu0 %235
    %237 = vset.pattern.permute.xlu0 0
    %238 = vperm.xlu0 %237, %v209
    %v239 = vpop.permute.xlu0 %238
    %240 = vset.pattern.permute.xlu0 0
    %241 = vperm.xlu0 %240, %v211
    %v242 = vpop.permute.xlu0 %241
    %243 = vset.pattern.permute.xlu0 0
    %244 = vperm.xlu0 %243, %v213
    %v245 = vpop.permute.xlu0 %244
    %v246 = vlaneseq
    %v247 = vshrl.u32 %v246, 7
    %v248 = vsub.s32 %v97, %v247
    %v249 = vrot.slane %v224, %v248
    %v250 = vlaneseq
    %v251 = vshrl.u32 %v250, 7
    %v252 = vsub.s32 %v97, %v251
    %v253 = vrot.slane %v227, %v252
    %v254 = vlaneseq
    %v255 = vshrl.u32 %v254, 7
    %v256 = vsub.s32 %v97, %v255
    %v257 = vrot.slane %v230, %v256
    %v258 = vlaneseq
    %v259 = vshrl.u32 %v258, 7
    %v260 = vsub.s32 %v97, %v259
    %v261 = vrot.slane %v233, %v260
    %v262 = vlaneseq
    %v263 = vshrl.u32 %v262, 7
    %v264 = vsub.s32 %v97, %v263
    %v265 = vrot.slane %v236, %v264
    %v266 = vlaneseq
    %v267 = vshrl.u32 %v266, 7
    %v268 = vsub.s32 %v97, %v267
    %v269 = vrot.slane %v239, %v268
    %v270 = vlaneseq
    %v271 = vshrl.u32 %v270, 7
    %v272 = vsub.s32 %v97, %v271
    %v273 = vrot.slane %v242, %v272
    %v274 = vlaneseq
    %v275 = vshrl.u32 %v274, 7
    %v276 = vsub.s32 %v97, %v275
    %v277 = vrot.slane %v245, %v276
    %v278 = vsel %vm130, %v253, %v249
    %v279 = vsel %vm132, %v257, %v278
    %v280 = vsel %vm134, %v261, %v279
    %v281 = vsel %vm136, %v265, %v280
    %v282 = vsel %vm138, %v269, %v281
    %v283 = vsel %vm140, %v273, %v282
    %v284 = vsel %vm142, %v277, %v283
    %v286 = vsel %vm145, %v284, 0.0
    %287 = vadd.xlane.f32.xlu0 %v286
    %v288 = vpop.xlane.xlu0 %287
    %v289 = vrcp.pop %v288
    %v291 = vlaneseq
    %v292 = vshrl.u32 %v291, 7
    %v293 = vsub.s32 0, %v292
    %v294 = vrot.slane %v289, %v293
    %v295 = vlaneseq
    %v296 = vshrl.u32 %v295, 7
    %v297 = vsub.s32 1, %v296
    %v298 = vrot.slane %v289, %v297
    %v299 = vlaneseq
    %v300 = vshrl.u32 %v299, 7
    %v301 = vsub.s32 2, %v300
    %v302 = vrot.slane %v289, %v301
    %v303 = vlaneseq
    %v304 = vshrl.u32 %v303, 7
    %v305 = vsub.s32 3, %v304
    %v306 = vrot.slane %v289, %v305
    %v307 = vlaneseq
    %v308 = vshrl.u32 %v307, 7
    %v309 = vsub.s32 4, %v308
    %v310 = vrot.slane %v289, %v309
    %v311 = vlaneseq
    %v312 = vshrl.u32 %v311, 7
    %v313 = vsub.s32 5, %v312
    %v314 = vrot.slane %v289, %v313
    %v315 = vlaneseq
    %v316 = vshrl.u32 %v315, 7
    %v317 = vsub.s32 6, %v316
    %v318 = vrot.slane %v289, %v317
    %v319 = vlaneseq
    %v320 = vshrl.u32 %v319, 7
    %v321 = vsub.s32 7, %v320
    %v322 = vrot.slane %v289, %v321
    %v331 = vmul.f32 %v199, %v294
    %v332 = vmul.f32 %v201, %v298
    %v333 = vmul.f32 %v203, %v302
    %v334 = vmul.f32 %v205, %v306
    %v335 = vmul.f32 %v207, %v310
    %v336 = vmul.f32 %v209, %v314
    %v337 = vmul.f32 %v211, %v318
    %v338 = vmul.f32 %v213, %v322
    %340 = vset.pattern.permute.xlu0 0
    %341 = vperm.xlu0 %340, %v331
    %v342 = vpop.permute.xlu0 %341
    %345 = vset.pattern.permute.xlu0 0
    %346 = vperm.xlu0 %345, %v332
    %v347 = vpop.permute.xlu0 %346
    %350 = vset.pattern.permute.xlu0 0
    %351 = vperm.xlu0 %350, %v333
    %v352 = vpop.permute.xlu0 %351
    %355 = vset.pattern.permute.xlu0 0
    %356 = vperm.xlu0 %355, %v334
    %v357 = vpop.permute.xlu0 %356
    %360 = vset.pattern.permute.xlu0 0
    %361 = vperm.xlu0 %360, %v335
    %v362 = vpop.permute.xlu0 %361
    %365 = vset.pattern.permute.xlu0 0
    %366 = vperm.xlu0 %365, %v336
    %v367 = vpop.permute.xlu0 %366
    %370 = vset.pattern.permute.xlu0 0
    %371 = vperm.xlu0 %370, %v337
    %v372 = vpop.permute.xlu0 %371
    %375 = vset.pattern.permute.xlu0 0
    %376 = vperm.xlu0 %375, %v338
    %v377 = vpop.permute.xlu0 %376
    %v379 = vmul.f32 %v30, %v342
    %v380 = vmul.f32 %v31, %v347
    %v381 = vmul.f32 %v32, %v352
    %v382 = vmul.f32 %v33, %v357
    %v383 = vmul.f32 %v34, %v362
    %v384 = vmul.f32 %v35, %v367
    %v385 = vmul.f32 %v36, %v372
    %v386 = vmul.f32 %v37, %v377
    %v387 = vsel %vm54, %v379, 0.0
    %v388 = vrot.slane %v387, 4
    %v389 = vadd.f32 %v387, %v388
    %v390 = vrot.slane %v389, 2
    %v391 = vadd.f32 %v389, %v390
    %v392 = vrot.slane %v391, 1
    %v393 = vadd.f32 %v391, %v392
    %v394 = vsel %vm54, %v380, 0.0
    %v395 = vrot.slane %v394, 4
    %v396 = vadd.f32 %v394, %v395
    %v397 = vrot.slane %v396, 2
    %v398 = vadd.f32 %v396, %v397
    %v399 = vrot.slane %v398, 1
    %v400 = vadd.f32 %v398, %v399
    %v401 = vsel %vm54, %v381, 0.0
    %v402 = vrot.slane %v401, 4
    %v403 = vadd.f32 %v401, %v402
    %v404 = vrot.slane %v403, 2
    %v405 = vadd.f32 %v403, %v404
    %v406 = vrot.slane %v405, 1
    %v407 = vadd.f32 %v405, %v406
    %v408 = vsel %vm54, %v382, 0.0
    %v409 = vrot.slane %v408, 4
    %v410 = vadd.f32 %v408, %v409
    %v411 = vrot.slane %v410, 2
    %v412 = vadd.f32 %v410, %v411
    %v413 = vrot.slane %v412, 1
    %v414 = vadd.f32 %v412, %v413
    %v415 = vsel %vm54, %v383, 0.0
    %v416 = vrot.slane %v415, 4
    %v417 = vadd.f32 %v415, %v416
    %v418 = vrot.slane %v417, 2
    %v419 = vadd.f32 %v417, %v418
    %v420 = vrot.slane %v419, 1
    %v421 = vadd.f32 %v419, %v420
    %v422 = vsel %vm54, %v384, 0.0
    %v423 = vrot.slane %v422, 4
    %v424 = vadd.f32 %v422, %v423
    %v425 = vrot.slane %v424, 2
    %v426 = vadd.f32 %v424, %v425
    %v427 = vrot.slane %v426, 1
    %v428 = vadd.f32 %v426, %v427
    %v429 = vsel %vm54, %v385, 0.0
    %v430 = vrot.slane %v429, 4
    %v431 = vadd.f32 %v429, %v430
    %v432 = vrot.slane %v431, 2
    %v433 = vadd.f32 %v431, %v432
    %v434 = vrot.slane %v433, 1
    %v435 = vadd.f32 %v433, %v434
    %v436 = vsel %vm54, %v386, 0.0
    %v437 = vrot.slane %v436, 4
    %v438 = vadd.f32 %v436, %v437
    %v439 = vrot.slane %v438, 2
    %v440 = vadd.f32 %v438, %v439
    %v441 = vrot.slane %v440, 1
    %v442 = vadd.f32 %v440, %v441
    %v451 = vsel %vm130, %v400, %v393
    %v452 = vsel %vm132, %v407, %v451
    %v453 = vsel %vm134, %v414, %v452
    %v454 = vsel %vm136, %v421, %v453
    %v455 = vsel %vm138, %v428, %v454
    %v456 = vsel %vm140, %v435, %v455
    %v457 = vsel %vm142, %v442, %v456
    %459 = vst.msk [vmem:[#allocation6] sm:$0xff] %vm54, %v457
    // Predicated region
    $region18: #{tpu_custom_call.1} parent=1 // pred_check
      _
    $region19: #{tpu_custom_call.1} parent=1 // pred_check_branch
      %461 = sbr.rel (0) target = $region21
    $region20: #{tpu_custom_call.1} parent=1 // pred_region
      %s463 = ssub.s32 128, 128
      %464 = vsyncadd [#allocation5], %s463
      %s466 = sshll.u32 [#allocation6], 4
      %s467 = int_to_ptr.vmem [resolvable:$true] %s466
      %469 = dma.vmem_to_hbm [thread:$0]  %s467, 128, %s3, [#allocation5]
    $region21: #{tpu_custom_call.1} parent=1 // pred_fallthru
      _
    // Predicated region
    $region22: #{tpu_custom_call.1} parent=1 // pred_check
      _
    $region23: #{tpu_custom_call.1} parent=1 // pred_check_branch
      %471 = sbr.rel (0) target = $region25
    $region24: #{tpu_custom_call.1} parent=1 // pred_region
      %472 = dma.done [#allocation5], 128
    $region25: #{tpu_custom_call.1} parent=1 // pred_fallthru
      _
    %473 = vsyncpa [#allocation4], 1
    %474 = vsyncpa [#allocation5], 1

</llo_original>
